<compile_context>
chip_gen: v6e
topology: v6e:2x2x1
jax: 0.10.0
libtpu: 0.0.40
codegen_flags: <defaults>
</compile_context>

<pallas_src>
import functools

import jax
import jax.numpy as jnp
from jax import lax
from jax.experimental import pallas as pl
from jax.experimental.pallas import tpu as pltpu

EPS = 1e-5
LANE = 128


def _ceil_to(x, m):
    return ((x + m - 1) // m) * m


def _chip_config():
    """Best-effort per-generation knobs: (vmem_limit_bytes, gemm row-tile cap, elementwise row-tile cap)."""
    vmem_cap = 64 << 20
    chip = ""
    try:
        info = pltpu.get_tpu_info()
        vmem_cap = int(getattr(info, "vmem_capacity_bytes", vmem_cap))
        chip = str(getattr(info, "chip_version", getattr(info, "version", ""))).lower()
    except Exception:
        pass
    big_vmem = vmem_cap >= (100 << 20)                    # v5e / v6e: 128 MiB physical VMEM
    vmem_limit = (64 << 20) if big_vmem else (32 << 20)   # keep headroom on v7x (64 MiB)
    # v5e's MXU is 4x128x128: a 128-row LHS tile matches the native pass.
    # TODO(synk): chip_version attribute name is best-effort; unknown chips keep 256.
    tm_g = 128 if ("v5e" in chip or "5_lite" in chip or "5 lite" in chip) else 256
    tm_e = 2048 if big_vmem else 1024
    return vmem_limit, tm_g, tm_e


_VMEM_LIMIT, _TM_GEMM, _TM_ELEM = _chip_config()


def _cparams():
    return pltpu.CompilerParams(
        dimension_semantics=("parallel",),
        vmem_limit_bytes=_VMEM_LIMIT,
    )


def _pad_rows(a, rows):
    if a.shape[0] == rows:
        return a
    if a.shape[0] > rows:
        return a[:rows]
    return jnp.pad(a, ((0, rows - a.shape[0]), (0, 0)))


def _pad_lane(v, cpad, fill):
    v = v.astype(jnp.float32)
    c = v.shape[0]
    if c == cpad:
        return v
    return jnp.concatenate([v, jnp.full((cpad - c,), fill, jnp.float32)])


def _pad_plane_rows(a3, m2p):
    """(n, m2, k) -> (n*m2p, k) with zero per-image row padding (so conv2 can block per image)."""
    n, m2, k = a3.shape
    if m2 != m2p:
        a3 = jnp.pad(a3, ((0, 0), (0, m2p - m2), (0, 0)))
    return a3.reshape(n * m2p, k)


# ----------------------------------------------------------------------------
# GEMM kernel with fused BatchNorm batch statistics (conv1 / 1x1-shortcut path)
# ----------------------------------------------------------------------------
def _gemm_stats_kernel(a_ref, b_ref, o_ref, ps_ref, pq_ref):
    acc = jnp.dot(a_ref[...], b_ref[...], preferred_element_type=jnp.float32)
    o_ref[...] = acc.astype(o_ref.dtype)
    # per-tile partial channel sum / sum-of-squares for BatchNorm (finished in plain JAX)
    s = jnp.sum(acc, axis=0, keepdims=True)
    q = jnp.sum(acc * acc, axis=0, keepdims=True)
    row0 = lax.broadcasted_iota(jnp.int32, (8, acc.shape[1]), 0) == 0
    ps_ref[...] = jnp.where(row0, s, 0.0)
    pq_ref[...] = jnp.where(row0, q, 0.0)


def conv_gemm_with_stats(a, b, out_dtype, tm):
    """a: [Mp, K] bf16 (rows past the real M are zero), b: [K, C] bf16, C lane-dense.

    Returns (out [Mp, C], channel_sum [C] f32, channel_sumsq [C] f32).  Zero padding rows
    contribute exactly 0 to both sums, so the caller divides by the real element count.
    The full (K, C) weight stays VMEM-resident (ResNet-scale weights are tiny in bf16).
    """
    mp, k = a.shape
    c = b.shape[1]
    assert mp % tm == 0
    ntiles = mp // tm
    out, ps, pq = pl.pallas_call(
        _gemm_stats_kernel,
        out_shape=(
            jax.ShapeDtypeStruct((mp, c), out_dtype),
            jax.ShapeDtypeStruct((ntiles * 8, c), jnp.float32),
            jax.ShapeDtypeStruct((ntiles * 8, c), jnp.float32),
        ),
        grid=(ntiles,),
        in_specs=[
            pl.BlockSpec((tm, k), lambda i: (i, 0)),
            pl.BlockSpec((k, c), lambda i: (0, 0)),
        ],
        out_specs=(
            pl.BlockSpec((tm, c), lambda i: (i, 0)),
            pl.BlockSpec((8, c), lambda i: (i, 0)),
            pl.BlockSpec((8, c), lambda i: (i, 0)),
        ),
        compiler_params=_cparams(),
    )(a, b)
    return out, jnp.sum(ps, axis=0), jnp.sum(pq, axis=0)


# ----------------------------------------------------------------------------
# Direct 3x3 / stride-1 / pad-1 conv kernel (conv2): no HBM im2col materialization.
# Fuses BN1-apply + ReLU on its input and BN2 batch statistics on its output.
# The 9 taps are staged into a bf16 VMEM im2col slab -> ONE K=9*C MXU matmul per chunk.
# ----------------------------------------------------------------------------
def _direct3x3_kernel(o1_ref, sc_ref, sh_ref, w_ref, o_ref, ps_ref, pq_ref,
                      apad_ref, cols_ref, *, wo, m2, pad, rchunk):
    m2p, c = o1_ref.shape

    # fused BN1-apply + ReLU on this image's raw conv1 output (bf16 in HBM, f32 math)
    act = jnp.maximum(o1_ref[...].astype(jnp.float32) * sc_ref[...] + sh_ref[...], 0.0)
    if m2p != m2:
        # zero the per-image row padding so it contributes nothing to taps or statistics
        rowid = lax.broadcasted_iota(jnp.int32, (m2p, c), 0)
        act = jnp.where(rowid < m2, act, 0.0)

    # zero halo + activation in a flat (row-major) VMEM scratch: every 3x3 tap is then a
    # static shifted slice; halo reads are exactly the conv's implicit zero padding.
    zhalo = jnp.zeros((pad, c), jnp.float32)
    apad_ref[pl.ds(0, pad), :] = zhalo
    apad_ref[pl.ds(pad + m2p, pad), :] = zhalo
    apad_ref[pl.ds(pad, m2p), :] = act

    row0 = lax.broadcasted_iota(jnp.int32, (8, c), 0) == 0
    s_tot = jnp.zeros((8, c), jnp.float32)
    q_tot = jnp.zeros((8, c), jnp.float32)

    # row-chunked in-VMEM im2col: stage 9 shifted taps into a (rc, 9*C) bf16 slab and do a
    # single K=9*C matmul per chunk (MXU accumulates over all taps internally).
    for ci in range((m2p + rchunk - 1) // rchunk):
        r0 = ci * rchunk
        rc = min(rchunk, m2p - r0)
        # in-kernel column-boundary masks: output col 0 must not read tap col w-1, output
        # col Wo-1 must not read tap col w+1 (they'd wrap into the adjacent spatial row).
        flat_i = r0 + lax.broadcasted_iota(jnp.int32, (rc, c), 0)
        flat_f = flat_i.astype(jnp.float32)
        col = flat_f - jnp.floor(flat_f / float(wo)) * float(wo)   # exact for ints < 2^24
        not_first = col > 0.5
        not_last = col < (wo - 1.5)
        for di in range(3):
            for dj in range(3):
                k = (1 - di) * wo + (1 - dj)   # tap value for flat row i lives at act[i - k]
                tap = apad_ref[pl.ds(pad - k + r0, rc), :]
                if dj == 0:
                    tap = jnp.where(not_first, tap, 0.0)
                elif dj == 2:
                    tap = jnp.where(not_last, tap, 0.0)
                cols_ref[pl.ds(0, rc), pl.ds((di * 3 + dj) * c, c)] = tap.astype(jnp.bfloat16)
        acc = jnp.dot(cols_ref[pl.ds(0, rc), :], w_ref[...],
                      preferred_element_type=jnp.float32)
        if m2p != m2:
            acc = jnp.where(flat_i < m2, acc, 0.0)     # padded output rows -> exactly zero
        o_ref[pl.ds(r0, rc), :] = acc.astype(o_ref.dtype)
        # fused BN2 batch statistics (per-image partials; finished in plain JAX)
        s_tot = s_tot + jnp.where(row0, jnp.sum(acc, axis=0, keepdims=True), 0.0)
        q_tot = q_tot + jnp.where(row0, jnp.sum(acc * acc, axis=0, keepdims=True), 0.0)

    ps_ref[...] = s_tot
    pq_ref[...] = q_tot


def conv3x3_direct(o1_2d, scale1, shift1, w_flat, n, ho, wo, m2p):
    """3x3 / stride-1 / pad-1 conv of relu(BN1(.)) applied to the raw conv1 output.

    o1_2d:  [N*m2p, C] bf16 (raw conv1 output; each image plane row-padded to m2p)
    w_flat: [9*C, C]   bf16 (tap-major weights, (di,dj) blocks of C rows)
    Returns (out [N*m2p, C] bf16, channel_sum [C] f32, channel_sumsq [C] f32).
    """
    m2 = ho * wo
    c = o1_2d.shape[-1]
    pad = _ceil_to(wo + 1, 8)
    rchunk = m2p if m2p <= 512 else 512
    kern = functools.partial(_direct3x3_kernel, wo=wo, m2=m2, pad=pad, rchunk=rchunk)
    # TODO(synk): on v7x, row-band the grid (N x bands with a 1-row halo) for megacore
    # sharding and single-buffer w_flat with pipeline_mode=pl.Buffered(1).
    out, ps, pq = pl.pallas_call(
        kern,
        out_shape=(
            jax.ShapeDtypeStruct((n * m2p, c), jnp.bfloat16),
            jax.ShapeDtypeStruct((n * 8, c), jnp.float32),
            jax.ShapeDtypeStruct((n * 8, c), jnp.float32),
        ),
        grid=(n,),
        in_specs=[
            pl.BlockSpec((m2p, c), lambda i: (i, 0)),
            pl.BlockSpec((1, c), lambda i: (0, 0)),
            pl.BlockSpec((1, c), lambda i: (0, 0)),
            pl.BlockSpec((9 * c, c), lambda i: (0, 0)),
        ],
        out_specs=(
            pl.BlockSpec((m2p, c), lambda i: (i, 0)),
            pl.BlockSpec((8, c), lambda i: (i, 0)),
            pl.BlockSpec((8, c), lambda i: (i, 0)),
        ),
        scratch_shapes=[
            pltpu.VMEM((2 * pad + m2p, c), jnp.float32),      # zero-haloed activation
            pltpu.VMEM((rchunk, 9 * c), jnp.bfloat16),        # staged im2col slab
        ],
        compiler_params=_cparams(),
    )(o1_2d, scale1, shift1, w_flat)
    return out, jnp.sum(ps, axis=0), jnp.sum(pq, axis=0)


# ----------------------------------------------------------------------------
# Final fused elementwise pass: BN2-apply + shortcut BN-apply + residual add + ReLU
# (bf16 reads, f32 math / output store)
# ----------------------------------------------------------------------------
def _bn_add_bn_relu_kernel(o_ref, r_ref, s2_ref, h2_ref, sr_ref, hr_ref, y_ref):
    y = (o_ref[...].astype(jnp.float32) * s2_ref[...] + h2_ref[...]
         + r_ref[...].astype(jnp.float32) * sr_ref[...] + hr_ref[...])
    y_ref[...] = jnp.maximum(y, 0.0)


def bn_add_bn_relu(o2, r, s2, h2, sr, hr, tm):
    mp, c = o2.shape
    assert mp % tm == 0
    return pl.pallas_call(
        _bn_add_bn_relu_kernel,
        out_shape=jax.ShapeDtypeStruct((mp, c), jnp.float32),
        grid=(mp // tm,),
        in_specs=[
            pl.BlockSpec((tm, c), lambda i: (i, 0)),
            pl.BlockSpec((tm, c), lambda i: (i, 0)),
            pl.BlockSpec((1, c), lambda i: (0, 0)),
            pl.BlockSpec((1, c), lambda i: (0, 0)),
            pl.BlockSpec((1, c), lambda i: (0, 0)),
            pl.BlockSpec((1, c), lambda i: (0, 0)),
        ],
        out_specs=pl.BlockSpec((tm, c), lambda i: (i, 0)),
        compiler_params=_cparams(),
    )(o2, r, s2, h2, sr, hr)


# ----------------------------------------------------------------------------
# Host-side glue
# ----------------------------------------------------------------------------
def _im2col(x_nhwc, k, stride, pad):
    xp = jnp.pad(x_nhwc, ((0, 0), (pad, pad), (pad, pad), (0, 0)))
    n, hp, wp, c = xp.shape
    ho = (hp - k) // stride + 1
    wo = (wp - k) // stride + 1
    patches = [xp[:, di:di + stride * ho:stride, dj:dj + stride * wo:stride, :]
               for di in range(k) for dj in range(k)]
    cols = jnp.concatenate(patches, axis=-1)             # (kh, kw, c) column order
    return cols.reshape(n, ho * wo, k * k * c), (ho, wo)


def _bn_scale_shift(s, q, count, gamma, beta):
    mean = s / count
    var = jnp.maximum(q / count - mean * mean, 0.0)       # biased var (BN training mode)
    # TODO(synk): single-pass E[x^2]-E[x]^2 can lose precision for huge-magnitude
    # activations; switch to centered / Welford-style partials if that regime matters.
    scale = gamma * lax.rsqrt(var + EPS)
    shift = beta - mean * scale
    return scale.reshape(1, -1), shift.reshape(1, -1)


def resnet_block_forward(x_nchw, p, stride):
    """x_nchw: [N, Cin, H, W] f32 -> [N, Cout, Ho, Wo] f32 (BatchNorm training mode)."""
    # TODO(synk): accepting NHWC at the block boundary would drop this transpose (and the
    # matching output transpose); kept to preserve the PyTorch NCHW interface.
    x = jnp.transpose(x_nchw, (0, 2, 3, 1)).astype(jnp.float32)   # NHWC
    n, h, w, cin = x.shape
    cout = p["w1"].shape[-1]
    cpad = _ceil_to(cout, LANE)                           # lane-dense channel dim everywhere

    # Channel-padded bf16 weights.  Conv biases (b1/b2/br) are intentionally dropped:
    # BatchNorm's batch-mean subtraction makes them an exact no-op on the block output.
    w1 = jnp.zeros((9 * cin, cpad), jnp.float32).at[:, :cout].set(
        p["w1"].reshape(9 * cin, cout)).astype(jnp.bfloat16)
    w2 = jnp.zeros((3, 3, cpad, cpad), jnp.float32).at[:, :, :cout, :cout].set(
        p["w2"]).reshape(9 * cpad, cpad).astype(jnp.bfloat16)

    g1, be1 = _pad_lane(p["g1"], cpad, 1.0), _pad_lane(p["be1"], cpad, 0.0)
    g2, be2 = _pad_lane(p["g2"], cpad, 1.0), _pad_lane(p["be2"], cpad, 0.0)

    # ---- conv1 (3x3 / stride) as an im2col GEMM with fused BN1 statistics ----
    # K1 = 9*Cin is small here; the 9x expansion that actually hurts (K = 9*Cout for conv2)
    # is avoided by the direct kernel below.
    # TODO(synk): a strided direct variant would remove this host slab too for large Cin.
    cols1, (ho, wo) = _im2col(x, 3, stride, 1)
    m2 = ho * wo
    m2p = _ceil_to(m2, 8)        # per-image plane rows, padded so conv2 is always direct
    m_real = n * m2              # real (unpadded) element count for the BN statistics
    m_rows = n * m2p

    tm_g = min(_TM_GEMM, _ceil_to(m_rows, 8))
    mp_g = _ceil_to(m_rows, tm_g)
    cols1 = _pad_rows(_pad_plane_rows(cols1, m2p), mp_g).astype(jnp.bfloat16)
    o1, s1, q1 = conv_gemm_with_stats(cols1, w1, jnp.bfloat16, tm_g)
    sc1, sh1 = _bn_scale_shift(s1, q1, m_real, g1, be1)

    # ---- conv2 (3x3 / stride 1): direct kernel; BN1-apply + ReLU fused into its input ----
    o2, s2, q2 = conv3x3_direct(o1[:m_rows], sc1, sh1, w2, n, ho, wo, m2p)
    sc2, sh2 = _bn_scale_shift(s2, q2, m_real, g2, be2)

    # ---- shortcut ----
    if stride != 1:
        wr = jnp.zeros((cin, cpad), jnp.float32).at[:, :cout].set(
            p["wr"].reshape(cin, cout)).astype(jnp.bfloat16)
        colsr = x[:, ::stride, ::stride, :].reshape(n, m2, cin)   # 1x1/stride: pure subsample
        colsr = _pad_rows(_pad_plane_rows(colsr, m2p), mp_g).astype(jnp.bfloat16)
        r, sr_, qr_ = conv_gemm_with_stats(colsr, wr, jnp.bfloat16, tm_g)
        scr, shr = _bn_scale_shift(sr_, qr_, m_real,
                                   _pad_lane(p["gr"], cpad, 1.0),
                                   _pad_lane(p["ber"], cpad, 0.0))
    else:
        assert cin == cout, "identity shortcut requires in_channels == out_channels"
        r3 = jnp.pad(x.reshape(n, m2, cin), ((0, 0), (0, 0), (0, cpad - cin)))
        r = _pad_plane_rows(r3, m2p).astype(jnp.bfloat16)
        scr = jnp.ones((1, cpad), jnp.float32)
        shr = jnp.zeros((1, cpad), jnp.float32)

    # ---- BN2-apply + shortcut-BN-apply + residual add + ReLU in a single fused pass ----
    tm_e = min(_TM_ELEM, _ceil_to(m_rows, 8))
    mp_e = _ceil_to(m_rows, tm_e)
    y = bn_add_bn_relu(_pad_rows(o2, mp_e), _pad_rows(r, mp_e), sc2, sh2, scr, shr, tm_e)

    y = y[:m_rows].reshape(n, m2p, cpad)[:, :m2, :cout].reshape(n, ho, wo, cout)
    return jnp.transpose(y, (0, 3, 1, 2))                 # back to NCHW


# ----------------------------------------------------------------------------
# Pure-JAX references for the correctness check
# ----------------------------------------------------------------------------
def ref_block(x_nchw, p, stride, *, match_bf16=False, use_bias=True):
    """match_bf16=True mirrors the kernel's precision policy: bf16 matmul operands and
    bf16 storage of the intermediates (o1, o2, shortcut); f32 everything else."""
    cast = (lambda t: t.astype(jnp.bfloat16).astype(jnp.float32)) if match_bf16 else (lambda t: t)

    def conv(x, w, b, s, pad):
        y = lax.conv_general_dilated(
            cast(x), cast(w), (s, s), [(pad, pad), (pad, pad)],
            dimension_numbers=("NCHW", "HWIO", "NCHW"),
            preferred_element_type=jnp.float32)
        return y + b[None, :, None, None] if use_bias else y

    def bn_stats(t, g, bta):
        m = t.mean(axis=(0, 2, 3))
        v = t.var(axis=(0, 2, 3))
        sc = g * lax.rsqrt(v + EPS)
        return sc[None, :, None, None], (bta - m * sc)[None, :, None, None]

    o1 = conv(x_nchw, p["w1"], p["b1"], stride, 1)
    sc1, sh1 = bn_stats(o1, p["g1"], p["be1"])
    a1 = jnp.maximum(cast(o1) * sc1 + sh1, 0.0)           # kernel stores o1 in bf16
    o2 = conv(a1, p["w2"], p["b2"], 1, 1)
    sc2, sh2 = bn_stats(o2, p["g2"], p["be2"])
    o2h = cast(o2) * sc2 + sh2                            # kernel stores o2 in bf16
    if stride != 1:
        rr = conv(x_nchw, p["wr"], p["br"], stride, 0)
        scr, shr = bn_stats(rr, p["gr"], p["ber"])
        rh = cast(rr) * scr + shr                         # kernel stores r in bf16
    else:
        rh = cast(x_nchw)
    return jnp.maximum(o2h + rh, 0.0)


def _make_params(key, cin, cout):
    ks = jax.random.split(key, 12)
    return {
        "w1": 0.1 * jax.random.normal(ks[0], (3, 3, cin, cout), jnp.float32),
        "b1": 0.1 * jax.random.normal(ks[1], (cout,), jnp.float32),
        "g1": 1.0 + 0.1 * jax.random.normal(ks[2], (cout,), jnp.float32),
        "be1": 0.1 * jax.random.normal(ks[3], (cout,), jnp.float32),
        "w2": 0.1 * jax.random.normal(ks[4], (3, 3, cout, cout), jnp.float32),
        "b2": 0.1 * jax.random.normal(ks[5], (cout,), jnp.float32),
        "g2": 1.0 + 0.1 * jax.random.normal(ks[6], (cout,), jnp.float32),
        "be2": 0.1 * jax.random.normal(ks[7], (cout,), jnp.float32),
        "wr": 0.1 * jax.random.normal(ks[8], (1, 1, cin, cout), jnp.float32),
        "br": 0.1 * jax.random.normal(ks[9], (cout,), jnp.float32),
        "gr": 1.0 + 0.1 * jax.random.normal(ks[10], (cout,), jnp.float32),
        "ber": 0.1 * jax.random.normal(ks[11], (cout,), jnp.float32),
    }


if __name__ == "__main__":
    key = jax.random.PRNGKey(0)
    # (N, Cin, H, W, Cout, stride):
    #   case 0: stride!=1 exercises the conv1x1/BN shortcut (original test shape),
    #   case 1: H=W=14 exercises Ho*Wo % 8 != 0 (row-padded plane / in-kernel row mask),
    #   case 2: stride==1 exercises the identity shortcut.
    cases = [
        (2, 3, 16, 16, 8, 2),
        (2, 3, 14, 14, 8, 2),
        (2, 8, 14, 14, 8, 1),
    ]
    for idx, (N, Cin, H, W, Cout, stride) in enumerate(cases):
        kp, kx, key = jax.random.split(key, 3)
        params = _make_params(kp, Cin, Cout)
        x = jax.random.normal(kx, (N, Cin, H, W), jnp.float32)
        ho = (H - 1) // stride + 1
        wo = (W - 1) // stride + 1

        y = jax.block_until_ready(resnet_block_forward(x, params, stride))
        assert y.shape == (N, Cout, ho, wo), (idx, y.shape, (N, Cout, ho, wo))

        # (1) precision-matched reference: same bf16 cast points as the kernel, biases
        #     dropped (exact under training-mode BN).  Tolerance leaves room for a 1-ulp
        #     bf16 rounding divergence of the stored intermediates (o1/o2/r) between the
        #     Pallas GEMMs' and lax.conv's f32 accumulation orders.
        y_match = ref_block(x, params, stride, match_bf16=True, use_bias=False)
        err_m = float(jnp.max(jnp.abs(y - y_match)))
        assert err_m < 1.2e-2, (idx, err_m)

        # (2) full-f32 reference WITH conv biases: loose bound that only absorbs bf16-MXU
        #     rounding; also empirically confirms the bias-drop is a no-op under BatchNorm.
        y_ref = ref_block(x, params, stride, match_bf16=False, use_bias=True)
        err_f = float(jnp.max(jnp.abs(y - y_ref)))
        assert err_f < 0.2, (idx, err_f)

    print("KERNEL_OK")
</pallas_src>

<mosaic_0001>
module attributes {stable_mosaic.version = 11 : i64} {
  func.func @_gemm_stats_kernel(%arg0: i32, %arg1: memref<128x27xbf16, #tpu.memory_space<vmem>>, %arg2: memref<27x128xbf16, #tpu.memory_space<vmem>>, %arg3: memref<128x128xbf16, #tpu.memory_space<vmem>>, %arg4: memref<8x128xf32, #tpu.memory_space<vmem>>, %arg5: memref<8x128xf32, #tpu.memory_space<vmem>>) attributes {dimension_semantics = [#tpu.dimension_semantics<parallel>], iteration_bounds = array<i64: 1>, scalar_prefetch = 0 : i64, scratch_operands = 0 : i64, tpu.core_type = #tpu.core_type<tc>, window_params = [{transform_indices = @transform_0, window_bounds = array<i64: 128, 27>}, {pipeline_mode = #tpu.pipeline_mode<synchronous>, transform_indices = @transform_1, window_bounds = array<i64: 27, 128>}, {transform_indices = @transform_2, window_bounds = array<i64: 128, 128>}, {transform_indices = @transform_3, window_bounds = array<i64: 8, 128>}, {transform_indices = @transform_4, window_bounds = array<i64: 8, 128>}]} {
    %c0 = arith.constant 0 : index
    %c0_0 = arith.constant 0 : index
    %0 = vector.load %arg1[%c0, %c0_0] : memref<128x27xbf16, #tpu.memory_space<vmem>>, vector<128x27xbf16>
    %c0_1 = arith.constant 0 : index
    %c0_2 = arith.constant 0 : index
    %1 = vector.load %arg2[%c0_1, %c0_2] : memref<27x128xbf16, #tpu.memory_space<vmem>>, vector<27x128xbf16>
    %cst = arith.constant dense<0.000000e+00> : vector<128x128xf32>
    %2 = tpu.matmul %0, %1, %cst {dimension_numbers = #tpu.dot_dimension_numbers<[1], [0], [0], [1], [0, 0, 1, 1], [], []>} : vector<128x27xbf16>, vector<27x128xbf16>, vector<128x128xf32> -> vector<128x128xf32>
    %3 = arith.truncf %2 : vector<128x128xf32> to vector<128x128xbf16>
    %c0_3 = arith.constant 0 : index
    %c0_4 = arith.constant 0 : index
    %4 = vector.load %arg3[%c0_3, %c0_4] : memref<128x128xbf16, #tpu.memory_space<vmem>>, vector<128x128xbf16>
    tpu.vector_store %arg3[%c0_3, %c0_4], %3 {strides = array<i32>} : memref<128x128xbf16, #tpu.memory_space<vmem>>, vector<128x128xbf16>,
    %cst_5 = arith.constant dense<0.000000e+00> : vector<128xf32>
    %5 = vector.multi_reduction <add>, %2, %cst_5 [0] : vector<128x128xf32> to vector<128xf32>
    %6 = vector.shape_cast %5 : vector<128xf32> to vector<1x128xf32>
    %7 = arith.mulf %2, %2 : vector<128x128xf32>
    %cst_6 = arith.constant dense<0.000000e+00> : vector<128xf32>
    %8 = vector.multi_reduction <add>, %7, %cst_6 [0] : vector<128x128xf32> to vector<128xf32>
    %9 = vector.shape_cast %8 : vector<128xf32> to vector<1x128xf32>
    %10 = tpu.iota {dimensions = array<i32: 0>} : vector<8x128xi32>
    %c0_i32 = arith.constant 0 : i32
    %11 = vector.broadcast %c0_i32 : i32 to vector<8x128xi32>
    %12 = arith.cmpi eq, %10, %11 : vector<8x128xi32>
    %cst_7 = arith.constant 0.000000e+00 : f32
    %13 = vector.shape_cast %6 : vector<1x128xf32> to vector<1x128xf32>
    %14 = vector.broadcast %13 : vector<1x128xf32> to vector<8x128xf32>
    %15 = vector.broadcast %cst_7 : f32 to vector<8x128xf32>
    %16 = arith.select %12, %14, %15 : vector<8x128xi1>, vector<8x128xf32>
    %c0_8 = arith.constant 0 : index
    %c0_9 = arith.constant 0 : index
    %17 = vector.load %arg4[%c0_8, %c0_9] : memref<8x128xf32, #tpu.memory_space<vmem>>, vector<8x128xf32>
    tpu.vector_store %arg4[%c0_8, %c0_9], %16 {strides = array<i32>} : memref<8x128xf32, #tpu.memory_space<vmem>>, vector<8x128xf32>,
    %cst_10 = arith.constant 0.000000e+00 : f32
    %18 = vector.shape_cast %9 : vector<1x128xf32> to vector<1x128xf32>
    %19 = vector.broadcast %18 : vector<1x128xf32> to vector<8x128xf32>
    %20 = vector.broadcast %cst_10 : f32 to vector<8x128xf32>
    %21 = arith.select %12, %19, %20 : vector<8x128xi1>, vector<8x128xf32>
    %c0_11 = arith.constant 0 : index
    %c0_12 = arith.constant 0 : index
    %22 = vector.load %arg5[%c0_11, %c0_12] : memref<8x128xf32, #tpu.memory_space<vmem>>, vector<8x128xf32>
    tpu.vector_store %arg5[%c0_11, %c0_12], %21 {strides = array<i32>} : memref<8x128xf32, #tpu.memory_space<vmem>>, vector<8x128xf32>,
    return
  }
  func.func @transform_0(%arg0: i32) -> (i32, i32) {
    %c0_i32 = arith.constant 0 : i32
    %c0_i32_0 = arith.constant 0 : i32
    return %arg0, %c0_i32 : i32, i32
  }
  func.func @transform_1(%arg0: i32) -> (i32, i32) {
    %c0_i32 = arith.constant 0 : i32
    %c0_i32_0 = arith.constant 0 : i32
    %c0_i32_1 = arith.constant 0 : i32
    return %c0_i32, %c0_i32_0 : i32, i32
  }
  func.func @transform_2(%arg0: i32) -> (i32, i32) {
    %c0_i32 = arith.constant 0 : i32
    %c0_i32_0 = arith.constant 0 : i32
    return %arg0, %c0_i32 : i32, i32
  }
  func.func @transform_3(%arg0: i32) -> (i32, i32) {
    %c0_i32 = arith.constant 0 : i32
    %c0_i32_0 = arith.constant 0 : i32
    return %arg0, %c0_i32 : i32, i32
  }
  func.func @transform_4(%arg0: i32) -> (i32, i32) {
    %c0_i32 = arith.constant 0 : i32
    %c0_i32_0 = arith.constant 0 : i32
    return %arg0, %c0_i32 : i32, i32
  }
}

</mosaic_0001>

<llo_original>
// kernel: tpu_custom_call.1
$region0: #{tpu_custom_call.1}
  #allocation0 [shape = 'u32[]', space=smem, size = 0x4, offset = 0x4, fixed_abs, tag = 'smem constant byte address 0x4 - core index']
  #allocation1 [shape = 'u32[144,128]{1,0:T(1,128)}', space=vmem, size = 0x12000, scoped, tag = 'internal scratch']
  %s0 = inlined_call_operand.vmem [shape: bf16[128,27], index: 0, kind: input, shape index: {}]
  %s1 = inlined_call_operand.vmem [shape: bf16[27,128], index: 1, kind: input, shape index: {}]
  %s2 = inlined_call_operand.hbm [shape: bf16[128,128], index: 2, kind: output, shape index: {0}]
  %s3 = inlined_call_operand.hbm [shape: f32[8,128], index: 3, kind: output, shape index: {1}]
  %s4 = inlined_call_operand.hbm [shape: f32[8,128], index: 4, kind: output, shape index: {2}]
  %5 = xla_tuple %s2, %s3, %s4
  %s6 = sld [smem:[#allocation0]]
  $region34: #{tpu_custom_call.1} parent=0
    _
  %s8 = ssub.s32 1, %s6
  %s9 = scalar_select 0, %s8, %s6
  $region1: #{tpu_custom_call.1} parent=0
    #allocation2 [shape = 'u8[32768]{0}', space=vmem, size = 0x8000, scoped, tag = 'output window, operand 0, single buffered']
    #allocation3 [shape = 's32[1]{0}', space=sflag, size = 0x4, scoped, tag = 'scoped memory for tpu_custom_call.1']
    #allocation4 [shape = 'u8[4096]{0}', space=vmem, size = 0x1000, scoped, tag = 'output window, operand 1, single buffered']
    #allocation5 [shape = 's32[1]{0}', space=sflag, size = 0x4, scoped, tag = 'scoped memory for tpu_custom_call.1']
    #allocation6 [shape = 'u8[4096]{0}', space=vmem, size = 0x1000, scoped, tag = 'output window, operand 2, single buffered']
    %10 = vsyncpa [#allocation3], 0
    %11 = vsyncpa [#allocation5], 0
    // Predicated region
    $region2: #{tpu_custom_call.1} parent=1 // pred_check
      _
    $region3: #{tpu_custom_call.1} parent=1 // pred_check_branch
      %13 = sbr.rel (0) target = $region5
    $region4: #{tpu_custom_call.1} parent=1 // pred_region
      _
    $region5: #{tpu_custom_call.1} parent=1 // pred_fallthru
      _
    // Predicated region
    $region6: #{tpu_custom_call.1} parent=1 // pred_check
      _
    $region7: #{tpu_custom_call.1} parent=1 // pred_check_branch
      %15 = sbr.rel (0) target = $region9
    $region8: #{tpu_custom_call.1} parent=1 // pred_region
      _
    $region9: #{tpu_custom_call.1} parent=1 // pred_fallthru
      _
    %v17 = vld [vmem:[%s0] sm:$0xf]
    %v18 = vld [vmem:[%s0 + $0x4] sm:$0xf]
    %v19 = vld [vmem:[%s0 + $0x8] sm:$0xf]
    %v20 = vld [vmem:[%s0 + $0xc] sm:$0xf]
    %v21 = vld [vmem:[%s0 + $0x10] sm:$0xf]
    %v22 = vld [vmem:[%s0 + $0x14] sm:$0xf]
    %v23 = vld [vmem:[%s0 + $0x18] sm:$0xf]
    %v24 = vld [vmem:[%s0 + $0x1c] sm:$0xf]
    %v25 = vld [vmem:[%s0 + $0x20] sm:$0xf]
    %v26 = vld [vmem:[%s0 + $0x24] sm:$0xf]
    %v27 = vld [vmem:[%s0 + $0x28] sm:$0xf]
    %v28 = vld [vmem:[%s0 + $0x2c] sm:$0xf]
    %v29 = vld [vmem:[%s0 + $0x30] sm:$0xf]
    %v30 = vld [vmem:[%s0 + $0x34] sm:$0xf]
    %v31 = vld [vmem:[%s0 + $0x38] sm:$0xf]
    %v32 = vld [vmem:[%s0 + $0x3c] sm:$0xf]
    %v33 = vld [vmem:[%s1] sm:$0xf]
    %v34 = vld [vmem:[%s1 + $0x4] sm:$0xf]
    %v35 = vld [vmem:[%s1 + $0x8] sm:$0xf]
    %v36 = vld [vmem:[%s1 + $0xc] sm:$0x3]
    %v53 = vunpack.c.l.b16 %v17
    %v54 = vunpack.c.l.b16 %v18
    %v55 = vunpack.c.l.b16 %v19
    %v56 = vunpack.c.l.b16 %v20
    %v57 = vunpack.c.l.b16 %v21
    %v58 = vunpack.c.l.b16 %v22
    %v59 = vunpack.c.l.b16 %v23
    %v60 = vunpack.c.l.b16 %v24
    %v61 = vunpack.c.l.b16 %v25
    %v62 = vunpack.c.l.b16 %v26
    %v63 = vunpack.c.l.b16 %v27
    %v64 = vunpack.c.l.b16 %v28
    %v65 = vunpack.c.l.b16 %v29
    %v66 = vunpack.c.l.b16 %v30
    %v67 = vunpack.c.l.b16 %v31
    %v68 = vunpack.c.l.b16 %v32
    %v69 = vpack.c.b16 %v54, %v53
    %v70 = vpack.c.b16 %v56, %v55
    %v71 = vpack.c.b16 %v58, %v57
    %v72 = vpack.c.b16 %v60, %v59
    %v73 = vpack.c.b16 %v62, %v61
    %v74 = vpack.c.b16 %v64, %v63
    %v75 = vpack.c.b16 %v66, %v65
    %v76 = vpack.c.b16 %v68, %v67
    %v81 = vunpack.c.l.b16 %v33
    %v82 = vunpack.c.l.b16 %v34
    %v83 = vunpack.c.l.b16 %v35
    %v84 = vunpack.c.l.b16 %v36
    %v85 = vpack.c.b16 %v82, %v81
    %v86 = vpack.c.b16 %v84, %v83
    %vm88 = vcmask 220160
    %v90 = vsel %vm88, %v69, 0
    %v93 = vsel %vm88, %v70, 0
    %v96 = vsel %vm88, %v71, 0
    %v99 = vsel %vm88, %v72, 0
    %v102 = vsel %vm88, %v73, 0
    %v105 = vsel %vm88, %v74, 0
    %v108 = vsel %vm88, %v75, 0
    %v111 = vsel %vm88, %v76, 0
    %vm113 = vcmask 1044480
    %vm114 = vcmask 1045504
    %v115 = vsel %vm113, 4294967295, 65535
    %v116 = vsel %vm114, %v115, 0
    %v118 = vand.u32 %v86, %v116
    %120 = vmatprep.subr.bf16.mxu0 0
    %121 = vmatpush1.bf16.msra.mxu0 0
    %122 = vmatprep.subr.bf16.mxu0 0
    %123 = vmatpush1.bf16.msra.mxu0 0
    %124 = vmatprep.subr.bf16.mxu0 0
    %125 = vmatpush1.bf16.msra.mxu0 0
    %126 = vmatprep.subr.bf16.mxu0 0
    %127 = vmatpush1.bf16.msra.mxu0 0
    %128 = vmatprep.subr.bf16.mxu0 0
    %129 = vmatpush1.bf16.msra.mxu0 0
    %130 = vmatprep.subr.bf16.mxu0 0
    %131 = vmatpush1.bf16.msra.mxu0 0
    %132 = vmatprep.subr.bf16.mxu0 0
    %133 = vmatpush1.bf16.msra.mxu0 %v118
    %134 = vmatprep.subr.bf16.mxu0 0
    %135 = vmatpush1.bf16.msra.mxu0 %v85
    %136 = vmatprep.subr.bf16.mxu0 0
    %137 = vmatpush2.bf16.msra.mxu0 0
    %138 = vmatprep.subr.bf16.mxu0 0
    %139 = vmatpush2.bf16.msra.mxu0 0
    %140 = vmatprep.subr.bf16.mxu0 0
    %141 = vmatpush2.bf16.msra.mxu0 0
    %142 = vmatprep.subr.bf16.mxu0 0
    %143 = vmatpush2.bf16.msra.mxu0 0
    %144 = vmatprep.subr.bf16.mxu0 0
    %145 = vmatpush2.bf16.msra.mxu0 0
    %146 = vmatprep.subr.bf16.mxu0 0
    %147 = vmatpush2.bf16.msra.mxu0 0
    %148 = vmatprep.subr.bf16.mxu0 0
    %149 = vmatpush2.bf16.msra.mxu0 0
    %150 = vmatprep.subr.bf16.mxu0 0
    %151 = vmatpush2.bf16.msra.mxu0 0
    %152 = vmatprep.mubr.bf16.mxu0 0
    %153 = vmatmul.mubr.bf16.gmra.mxu0 %v90
    %v154 = vpop.f32.mrf.mxu0
    %v155 = vadd.f32 0.0, %v154
    %v156 = vpop.f32.mrf.mxu0
    %v157 = vpop.f32.mrf.mxu0
    %v158 = vadd.f32 0.0, %v157
    %v159 = vpop.f32.mrf.mxu0
    %160 = vmatprep.mubr.bf16.mxu0 0
    %161 = vmatmul.mubr.bf16.gmra.mxu0 %v93
    %v162 = vpop.f32.mrf.mxu0
    %v163 = vadd.f32 0.0, %v162
    %v164 = vpop.f32.mrf.mxu0
    %v165 = vpop.f32.mrf.mxu0
    %v166 = vadd.f32 0.0, %v165
    %v167 = vpop.f32.mrf.mxu0
    %168 = vmatprep.mubr.bf16.mxu0 0
    %169 = vmatmul.mubr.bf16.gmra.mxu0 %v96
    %v170 = vpop.f32.mrf.mxu0
    %v171 = vadd.f32 0.0, %v170
    %v172 = vpop.f32.mrf.mxu0
    %v173 = vpop.f32.mrf.mxu0
    %v174 = vadd.f32 0.0, %v173
    %v175 = vpop.f32.mrf.mxu0
    %176 = vmatprep.mubr.bf16.mxu0 0
    %177 = vmatmul.mubr.bf16.gmra.mxu0 %v99
    %v178 = vpop.f32.mrf.mxu0
    %v179 = vadd.f32 0.0, %v178
    %v180 = vpop.f32.mrf.mxu0
    %v181 = vpop.f32.mrf.mxu0
    %v182 = vadd.f32 0.0, %v181
    %v183 = vpop.f32.mrf.mxu0
    %184 = vmatprep.mubr.bf16.mxu0 0
    %185 = vmatmul.mubr.bf16.gmra.mxu0 %v102
    %v186 = vpop.f32.mrf.mxu0
    %v187 = vadd.f32 0.0, %v186
    %v188 = vpop.f32.mrf.mxu0
    %v189 = vpop.f32.mrf.mxu0
    %v190 = vadd.f32 0.0, %v189
    %v191 = vpop.f32.mrf.mxu0
    %192 = vmatprep.mubr.bf16.mxu0 0
    %193 = vmatmul.mubr.bf16.gmra.mxu0 %v105
    %v194 = vpop.f32.mrf.mxu0
    %v195 = vadd.f32 0.0, %v194
    %v196 = vpop.f32.mrf.mxu0
    %v197 = vpop.f32.mrf.mxu0
    %v198 = vadd.f32 0.0, %v197
    %v199 = vpop.f32.mrf.mxu0
    %200 = vmatprep.mubr.bf16.mxu0 0
    %201 = vmatmul.mubr.bf16.gmra.mxu0 %v108
    %v202 = vpop.f32.mrf.mxu0
    %v203 = vadd.f32 0.0, %v202
    %v204 = vpop.f32.mrf.mxu0
    %v205 = vpop.f32.mrf.mxu0
    %v206 = vadd.f32 0.0, %v205
    %v207 = vpop.f32.mrf.mxu0
    %208 = vmatprep.mubr.bf16.mxu0 0
    %209 = vmatmul.mubr.bf16.gmra.mxu0 %v111
    %v210 = vpop.f32.mrf.mxu0
    %v211 = vadd.f32 0.0, %v210
    %v212 = vpop.f32.mrf.mxu0
    %v213 = vpop.f32.mrf.mxu0
    %v214 = vadd.f32 0.0, %v213
    %v215 = vpop.f32.mrf.mxu0
    %216 = vdwg.mxu0
    %v217 = vpack.c.bf16 %v158, %v155
    %v218 = vpack.c.bf16 %v166, %v163
    %v219 = vpack.c.bf16 %v174, %v171
    %v220 = vpack.c.bf16 %v182, %v179
    %v221 = vpack.c.bf16 %v190, %v187
    %v222 = vpack.c.bf16 %v198, %v195
    %v223 = vpack.c.bf16 %v206, %v203
    %v224 = vpack.c.bf16 %v214, %v211
    %v233 = vunpack.c.l.b16 %v217
    %v234 = vunpack.c.h.b16 %v217
    %v235 = vunpack.c.l.b16 %v218
    %v236 = vunpack.c.h.b16 %v218
    %v237 = vunpack.c.l.b16 %v219
    %v238 = vunpack.c.h.b16 %v219
    %v239 = vunpack.c.l.b16 %v220
    %v240 = vunpack.c.h.b16 %v220
    %v241 = vunpack.c.l.b16 %v221
    %v242 = vunpack.c.h.b16 %v221
    %v243 = vunpack.c.l.b16 %v222
    %v244 = vunpack.c.h.b16 %v222
    %v245 = vunpack.c.l.b16 %v223
    %v246 = vunpack.c.h.b16 %v223
    %v247 = vunpack.c.l.b16 %v224
    %v248 = vunpack.c.h.b16 %v224
    %v249 = vpack.c.b16 %v233, %v233
    %v250 = vpack.c.b16 %v234, %v234
    %v251 = vpack.c.b16 %v235, %v235
    %v252 = vpack.c.b16 %v236, %v236
    %v253 = vpack.c.b16 %v237, %v237
    %v254 = vpack.c.b16 %v238, %v238
    %v255 = vpack.c.b16 %v239, %v239
    %v256 = vpack.c.b16 %v240, %v240
    %v257 = vpack.c.b16 %v241, %v241
    %v258 = vpack.c.b16 %v242, %v242
    %v259 = vpack.c.b16 %v243, %v243
    %v260 = vpack.c.b16 %v244, %v244
    %v261 = vpack.c.b16 %v245, %v245
    %v262 = vpack.c.b16 %v246, %v246
    %v263 = vpack.c.b16 %v247, %v247
    %v264 = vpack.c.b16 %v248, %v248
    %281 = vst [vmem:[#allocation2] sm:$0xf] %v249
    %282 = vst [vmem:[#allocation2 + $0x4] sm:$0xf] %v250
    %283 = vst [vmem:[#allocation2 + $0x8] sm:$0xf] %v251
    %284 = vst [vmem:[#allocation2 + $0xc] sm:$0xf] %v252
    %285 = vst [vmem:[#allocation2 + $0x10] sm:$0xf] %v253
    %286 = vst [vmem:[#allocation2 + $0x14] sm:$0xf] %v254
    %287 = vst [vmem:[#allocation2 + $0x18] sm:$0xf] %v255
    %288 = vst [vmem:[#allocation2 + $0x1c] sm:$0xf] %v256
    %289 = vst [vmem:[#allocation2 + $0x20] sm:$0xf] %v257
    %290 = vst [vmem:[#allocation2 + $0x24] sm:$0xf] %v258
    %291 = vst [vmem:[#allocation2 + $0x28] sm:$0xf] %v259
    %292 = vst [vmem:[#allocation2 + $0x2c] sm:$0xf] %v260
    %293 = vst [vmem:[#allocation2 + $0x30] sm:$0xf] %v261
    %294 = vst [vmem:[#allocation2 + $0x34] sm:$0xf] %v262
    %295 = vst [vmem:[#allocation2 + $0x38] sm:$0xf] %v263
    %296 = vst [vmem:[#allocation2 + $0x3c] sm:$0xf] %v264
    %v297 = vadd.f32 %v155, %v158
    %v298 = vadd.f32 %v297, %v163
    %v299 = vadd.f32 %v298, %v166
    %v300 = vadd.f32 %v299, %v171
    %v301 = vadd.f32 %v300, %v174
    %v302 = vadd.f32 %v301, %v179
    %v303 = vadd.f32 %v302, %v182
    %v304 = vadd.f32 %v303, %v187
    %v305 = vadd.f32 %v304, %v190
    %v306 = vadd.f32 %v305, %v195
    %v307 = vadd.f32 %v306, %v198
    %v308 = vadd.f32 %v307, %v203
    %v309 = vadd.f32 %v308, %v206
    %v310 = vadd.f32 %v309, %v211
    %v311 = vadd.f32 %v310, %v214
    %v312 = vrot.slane %v311, 4
    %v313 = vadd.f32 %v311, %v312
    %v314 = vrot.slane %v313, 2
    %v315 = vadd.f32 %v313, %v314
    %v316 = vrot.slane %v315, 1
    %v317 = vadd.f32 %v315, %v316
    %v318 = vmul.f32 %v155, %v155
    %v319 = vmul.f32 %v158, %v158
    %v320 = vmul.f32 %v163, %v163
    %v321 = vmul.f32 %v166, %v166
    %v322 = vmul.f32 %v171, %v171
    %v323 = vmul.f32 %v174, %v174
    %v324 = vmul.f32 %v179, %v179
    %v325 = vmul.f32 %v182, %v182
    %v326 = vmul.f32 %v187, %v187
    %v327 = vmul.f32 %v190, %v190
    %v328 = vmul.f32 %v195, %v195
    %v329 = vmul.f32 %v198, %v198
    %v330 = vmul.f32 %v203, %v203
    %v331 = vmul.f32 %v206, %v206
    %v332 = vmul.f32 %v211, %v211
    %v333 = vmul.f32 %v214, %v214
    %v334 = vadd.f32 %v318, %v319
    %v335 = vadd.f32 %v334, %v320
    %v336 = vadd.f32 %v335, %v321
    %v337 = vadd.f32 %v336, %v322
    %v338 = vadd.f32 %v337, %v323
    %v339 = vadd.f32 %v338, %v324
    %v340 = vadd.f32 %v339, %v325
    %v341 = vadd.f32 %v340, %v326
    %v342 = vadd.f32 %v341, %v327
    %v343 = vadd.f32 %v342, %v328
    %v344 = vadd.f32 %v343, %v329
    %v345 = vadd.f32 %v344, %v330
    %v346 = vadd.f32 %v345, %v331
    %v347 = vadd.f32 %v346, %v332
    %v348 = vadd.f32 %v347, %v333
    %v349 = vrot.slane %v348, 4
    %v350 = vadd.f32 %v348, %v349
    %v351 = vrot.slane %v350, 2
    %v352 = vadd.f32 %v350, %v351
    %v353 = vrot.slane %v352, 1
    %v354 = vadd.f32 %v352, %v353
    %v355 = vlaneseq
    %v356 = vshrl.u32 %v355, 7
    %vm357 = vcmp.eq.s32.totalorder %v356, 0
    %v358 = vsel %vm357, %v317, 0.0
    %359 = vst [vmem:[#allocation4] sm:$0xff] %v358
    %v360 = vsel %vm357, %v354, 0.0
    %361 = vst [vmem:[#allocation6] sm:$0xff] %v360
    // Predicated region
    $region10: #{tpu_custom_call.1} parent=1 // pred_check
      _
    $region11: #{tpu_custom_call.1} parent=1 // pred_check_branch
      %363 = sbr.rel (0) target = $region13
    $region12: #{tpu_custom_call.1} parent=1 // pred_region
      %s365 = ssub.s32 1024, 1024
      %366 = vsyncadd [#allocation3], %s365
      %s367 = sshll.u32 [#allocation2], 4
      %s368 = int_to_ptr.vmem [resolvable:$true] %s367
      %373 = dma.vmem_to_hbm [thread:$0]  %s368, 1024, %s2, [#allocation3], 64, 64, 4
    $region13: #{tpu_custom_call.1} parent=1 // pred_fallthru
      _
    // Predicated region
    $region14: #{tpu_custom_call.1} parent=1 // pred_check
      _
    $region15: #{tpu_custom_call.1} parent=1 // pred_check_branch
      %375 = sbr.rel (0) target = $region17
    $region16: #{tpu_custom_call.1} parent=1 // pred_region
      %s377 = ssub.s32 128, 128
      %378 = vsyncadd [#allocation5], %s377
      %s380 = sshll.u32 [#allocation4], 4
      %s381 = int_to_ptr.vmem [resolvable:$true] %s380
      %383 = dma.vmem_to_hbm [thread:$0]  %s381, 128, %s3, [#allocation5]
    $region17: #{tpu_custom_call.1} parent=1 // pred_fallthru
      _
    // Predicated region
    $region18: #{tpu_custom_call.1} parent=1 // pred_check
      _
    $region19: #{tpu_custom_call.1} parent=1 // pred_check_branch
      %385 = sbr.rel (0) target = $region21
    $region20: #{tpu_custom_call.1} parent=1 // pred_region
      %s387 = ssub.s32 128, 128
      %388 = vsyncadd [#allocation5], %s387
      %s390 = sshll.u32 [#allocation6], 4
      %s391 = int_to_ptr.vmem [resolvable:$true] %s390
      %393 = dma.vmem_to_hbm [thread:$0]  %s391, 128, %s4, [#allocation5]
    $region21: #{tpu_custom_call.1} parent=1 // pred_fallthru
      _
    // Predicated region
    $region22: #{tpu_custom_call.1} parent=1 // pred_check
      _
    $region23: #{tpu_custom_call.1} parent=1 // pred_check_branch
      %395 = sbr.rel (0) target = $region25
    $region24: #{tpu_custom_call.1} parent=1 // pred_region
      %396 = dma.done [#allocation3], 1024
    $region25: #{tpu_custom_call.1} parent=1 // pred_fallthru
      _
    // Predicated region
    $region26: #{tpu_custom_call.1} parent=1 // pred_check
      _
    $region27: #{tpu_custom_call.1} parent=1 // pred_check_branch
      %398 = sbr.rel (0) target = $region29
    $region28: #{tpu_custom_call.1} parent=1 // pred_region
      %399 = dma.done [#allocation5], 128
    $region29: #{tpu_custom_call.1} parent=1 // pred_fallthru
      _
    // Predicated region
    $region30: #{tpu_custom_call.1} parent=1 // pred_check
      _
    $region31: #{tpu_custom_call.1} parent=1 // pred_check_branch
      %401 = sbr.rel (0) target = $region33
    $region32: #{tpu_custom_call.1} parent=1 // pred_region
      %402 = dma.done [#allocation5], 128
    $region33: #{tpu_custom_call.1} parent=1 // pred_fallthru
      _
    %403 = vsyncpa [#allocation3], 1
    %404 = vsyncpa [#allocation5], 1

</llo_original>
